<compile_context>
chip_gen: v6e
topology: v6e:2x2x1
jax: 0.10.0
libtpu: 0.0.40
codegen_flags: <defaults>
</compile_context>

<pallas_src>
import functools

import jax
import jax.numpy as jnp
from jax.experimental import pallas as pl
from jax.experimental.pallas import tpu as pltpu


def _round_up(n, m):
    return ((n + m - 1) // m) * m


def _cln_kernel(x_ref, cond_ref, wT_ref, w_ref, b_ref, o_ref, *,
                eps, h_real, matmul_dtype):
    x = x_ref[...].astype(jnp.float32)                       # (TR, Hp)
    hp = x.shape[-1]

    cond = cond_ref[...]
    if cond.dtype != matmul_dtype:                           # only when not pre-cast
        cond = cond.astype(matmul_dtype)

    # Fused beta/gamma projection on the MXU:
    #   (TR, Hp) @ (Hp, 2*Hp) -> [gamma | beta], split at a 128-lane boundary.
    gb = jnp.dot(cond, wT_ref[...], preferred_element_type=jnp.float32)
    gamma = gb[:, :hp]
    beta = gb[:, hp:]

    weight = w_ref[...] + gamma                              # (1,Hp) + (TR,Hp)
    bias = b_ref[...] + beta

    # TF-style layernorm (biased variance, eps inside sqrt).
    if h_real == hp:
        u = jnp.mean(x, axis=-1, keepdims=True)
        xc = x - u
        var = jnp.mean(xc * xc, axis=-1, keepdims=True)
    else:
        # Pad lanes of x are zero (host pad) so the sum already ignores them;
        # only xc needs masking before the variance / affine.
        inv_h = jnp.float32(1.0 / h_real)
        u = jnp.sum(x, axis=-1, keepdims=True) * inv_h
        lane = jax.lax.broadcasted_iota(jnp.int32, x.shape, 1)
        xc = jnp.where(lane < h_real, x - u, 0.0)
        var = jnp.sum(xc * xc, axis=-1, keepdims=True) * inv_h

    xn = xc * jax.lax.rsqrt(var + eps)
    o_ref[...] = (weight * xn + bias).astype(o_ref.dtype)


def conditional_layer_norm(x, cond, weight, bias, w_beta, w_gamma,
                           eps=1e-12, tile_rows=None,
                           matmul_dtype=jnp.bfloat16, stream_buffers=2):
    """x, cond: (B, S, H). weight, bias: (H,). w_beta, w_gamma: (H, H) PyTorch
    nn.Linear weights (out, in). Returns (B, S, H)."""
    B, S, H = x.shape
    N = B * S
    out_dtype = x.dtype
    isz = lambda d: jnp.dtype(d).itemsize

    # Lane-dense hidden dim; skip the pad copy entirely when H % 128 == 0.
    Hp = _round_up(max(H, 128), 128)
    pad_h = Hp - H
    x2 = x.reshape(N, H)
    cond2 = cond.reshape(N, H)
    if pad_h:
        x2 = jnp.pad(x2, ((0, 0), (0, pad_h)))
        # Cast fuses into the pad copy we are making anyway -> cheaper stream.
        cond2 = jnp.pad(cond2, ((0, 0), (0, pad_h))).astype(matmul_dtype)

    # Fused, pre-transposed projection weight [Wg^T | Wb^T] : (Hp, 2*Hp).
    wgT = jnp.asarray(w_gamma, jnp.float32).T
    wbT = jnp.asarray(w_beta, jnp.float32).T
    if pad_h:
        wgT = jnp.pad(wgT, ((0, pad_h), (0, pad_h)))
        wbT = jnp.pad(wbT, ((0, pad_h), (0, pad_h)))
    w_fused = jnp.concatenate([wgT, wbT], axis=1).astype(matmul_dtype)
    w_row = jnp.pad(jnp.asarray(weight, jnp.float32).reshape(1, H),
                    ((0, 0), (0, pad_h)))
    b_row = jnp.pad(jnp.asarray(bias, jnp.float32).reshape(1, H),
                    ((0, 0), (0, pad_h)))

    # ---- Generation-aware VMEM budget -------------------------------------
    try:
        vmem_cap = int(pltpu.get_tpu_info().vmem_capacity_bytes)
    except Exception:
        vmem_cap = 64 << 20                      # conservative (v7x per-TC)
    weight_bytes = Hp * (2 * Hp) * isz(w_fused.dtype) + 2 * Hp * 4
    # Per row: streamed x/cond (stream_buffers deep), streamed out (2 deep) and
    # ~8 f32 intermediate planes (x, xc/xn, (TR,2Hp) matmul result, weight, bias).
    per_row = Hp * (stream_buffers * (isz(x2.dtype) + isz(cond2.dtype))
                    + 2 * isz(out_dtype) + 8 * 4)
    row_mult = 8 * max(1, 4 // isz(out_dtype))   # sublane pack of the output
    budget = int(0.75 * vmem_cap) - weight_bytes - (4 << 20)
    tr_cap = (budget // per_row) // row_mult * row_mult if budget > 0 else 0
    tr_cap = max(row_mult, min(1024, tr_cap))

    # ---- Row tiling (>= 2 and preferably even grid steps for megacore) ----
    if tile_rows is None:
        tile_rows = min(tr_cap, _round_up(N, row_mult))
        steps = pl.cdiv(N, tile_rows)
        if steps == 1 and N > row_mult:
            tile_rows = _round_up(pl.cdiv(N, 2), row_mult)
        elif steps > 1 and steps % 2 == 1:
            tr_even = _round_up(pl.cdiv(N, steps + 1), row_mult)
            if pl.cdiv(N, tr_even) % 2 == 0:
                tile_rows = tr_even
    tile_rows = max(row_mult, _round_up(int(tile_rows), row_mult))
    grid = (pl.cdiv(N, tile_rows),)

    vmem_need = weight_bytes + tile_rows * per_row + (2 << 20)
    vmem_limit = int(min(max(vmem_need, 32 << 20), int(0.9 * vmem_cap)))

    # Advisory cost for XLA's scheduler around the custom call.
    flops = int(2 * N * Hp * (2 * Hp) + 10 * N * Hp)
    bytes_accessed = int(N * Hp * (isz(x2.dtype) + isz(cond2.dtype)
                                   + isz(out_dtype))
                         + w_fused.size * isz(w_fused.dtype) + 2 * Hp * 4)
    cost = pl.CostEstimate(flops=flops, transcendentals=int(N),
                           bytes_accessed=bytes_accessed)

    kernel = functools.partial(_cln_kernel, eps=float(eps), h_real=H,
                               matmul_dtype=matmul_dtype)

    def build_and_run(use_pipeline_mode):
        def spec(shape, index_map, nbuf):
            if use_pipeline_mode:
                return pl.BlockSpec(shape, index_map,
                                    pipeline_mode=pl.Buffered(nbuf))
            return pl.BlockSpec(shape, index_map)

        return pl.pallas_call(
            kernel,
            out_shape=jax.ShapeDtypeStruct((N, Hp), out_dtype),
            grid_spec=pltpu.PrefetchScalarGridSpec(
                num_scalar_prefetch=0,
                grid=grid,
                in_specs=[
                    spec((tile_rows, Hp), lambda i: (i, 0), stream_buffers),  # x
                    spec((tile_rows, Hp), lambda i: (i, 0), stream_buffers),  # cond
                    # Constant index_maps => fetched once, resident, 1 buffer.
                    spec((Hp, 2 * Hp), lambda i: (0, 0), 1),   # [Wg^T | Wb^T]
                    spec((1, Hp), lambda i: (0, 0), 1),        # weight row
                    spec((1, Hp), lambda i: (0, 0), 1),        # bias row
                ],
                out_specs=pl.BlockSpec((tile_rows, Hp), lambda i: (i, 0)),
            ),
            compiler_params=pltpu.CompilerParams(
                dimension_semantics=("parallel",),
                vmem_limit_bytes=vmem_limit),
            cost_estimate=cost,
        )(x2, cond2, w_fused, w_row, b_row)

    try:
        out = build_and_run(True)
    except Exception:
        # pipeline_mode / Buffered(1) unsupported on this jax version: fall
        # back to default double-buffering (identical numerics, more VMEM).
        out = build_and_run(False)

    if pad_h:
        out = out[:, :H]
    return out.reshape(B, S, H)


def _reference(x, cond, weight, bias, w_beta, w_gamma, eps=1e-12):
    # Pure-JAX reference mirroring the PyTorch forward exactly.
    beta = cond @ w_beta.T
    gamma = cond @ w_gamma.T
    w = weight + gamma
    b = bias + beta
    u = x.mean(-1, keepdims=True)
    std = ((x - u) ** 2).mean(-1, keepdims=True)
    xn = (x - u) / jnp.sqrt(std + eps)
    return w * xn + b


if __name__ == "__main__":
    key = jax.random.PRNGKey(0)

    # --- Case 1: small H (padded-lane path), B=2, S=8, H=32 ----------------
    B, S, H = 2, 8, 32
    kx, kc, kb, kg, key = jax.random.split(key, 5)
    x = jax.random.normal(kx, (B, S, H), jnp.float32)
    cond = jax.random.normal(kc, (B, S, H), jnp.float32)
    weight = jnp.ones((H,), jnp.float32)         # self.weight = ones(hidden)
    bias = jnp.zeros((H,), jnp.float32)          # self.bias   = zeros(hidden)
    w_beta = 0.02 * jax.random.normal(kb, (H, H), jnp.float32)   # beta_dense.weight
    w_gamma = 0.02 * jax.random.normal(kg, (H, H), jnp.float32)  # gamma_dense.weight

    ref = _reference(x, cond, weight, bias, w_beta, w_gamma)

    out_f32 = conditional_layer_norm(x, cond, weight, bias, w_beta, w_gamma,
                                     matmul_dtype=jnp.float32)
    out_f32 = jax.block_until_ready(out_f32)
    assert out_f32.shape == (B, S, H)
    assert jnp.allclose(out_f32, ref, atol=1e-5, rtol=1e-5), "f32 path mismatch"

    out_bf16 = conditional_layer_norm(x, cond, weight, bias, w_beta, w_gamma)
    out_bf16 = jax.block_until_ready(out_bf16)
    assert out_bf16.shape == (B, S, H)
    assert jnp.allclose(out_bf16, ref, atol=1e-2, rtol=1e-2), "bf16 path mismatch"

    # --- Case 2: lane-dense H (no pad/slice copies) + ragged row tail ------
    B2, S2, H2 = 2, 9, 128
    kx2, kc2, kb2, kg2, key = jax.random.split(key, 5)
    x2 = jax.random.normal(kx2, (B2, S2, H2), jnp.float32)
    cond2 = jax.random.normal(kc2, (B2, S2, H2), jnp.float32)
    weight2 = jnp.ones((H2,), jnp.float32)
    bias2 = jnp.zeros((H2,), jnp.float32)
    w_beta2 = 0.02 * jax.random.normal(kb2, (H2, H2), jnp.float32)
    w_gamma2 = 0.02 * jax.random.normal(kg2, (H2, H2), jnp.float32)

    ref2 = _reference(x2, cond2, weight2, bias2, w_beta2, w_gamma2)
    out2 = conditional_layer_norm(x2, cond2, weight2, bias2, w_beta2, w_gamma2,
                                  matmul_dtype=jnp.float32)
    out2 = jax.block_until_ready(out2)
    assert out2.shape == (B2, S2, H2)
    assert jnp.allclose(out2, ref2, atol=1e-3, rtol=1e-3), "lane-dense path mismatch"

    print("KERNEL_OK")
</pallas_src>

<mosaic_0001>
module attributes {stable_mosaic.version = 11 : i64} {
  func.func @_cln_kernel(%arg0: i32, %arg1: memref<8x128xf32, #tpu.memory_space<vmem>>, %arg2: memref<8x128xf32, #tpu.memory_space<vmem>>, %arg3: memref<128x256xf32, #tpu.memory_space<vmem>>, %arg4: memref<1x128xf32, #tpu.memory_space<vmem>>, %arg5: memref<1x128xf32, #tpu.memory_space<vmem>>, %arg6: memref<8x128xf32, #tpu.memory_space<vmem>>) attributes {dimension_semantics = [#tpu.dimension_semantics<parallel>], iteration_bounds = array<i64: 2>, scalar_prefetch = 0 : i64, scratch_operands = 0 : i64, tpu.core_type = #tpu.core_type<tc>, window_params = [{pipeline_mode = #tpu.pipeline_mode<double_buffered>, transform_indices = @transform_0, window_bounds = array<i64: 8, 128>}, {pipeline_mode = #tpu.pipeline_mode<double_buffered>, transform_indices = @transform_1, window_bounds = array<i64: 8, 128>}, {pipeline_mode = #tpu.pipeline_mode<synchronous>, transform_indices = @transform_2, window_bounds = array<i64: 128, 256>}, {pipeline_mode = #tpu.pipeline_mode<synchronous>, transform_indices = @transform_3, window_bounds = array<i64: 1, 128>}, {pipeline_mode = #tpu.pipeline_mode<synchronous>, transform_indices = @transform_4, window_bounds = array<i64: 1, 128>}, {transform_indices = @transform_5, window_bounds = array<i64: 8, 128>}]} {
    %c0 = arith.constant 0 : index
    %c0_0 = arith.constant 0 : index
    %0 = vector.load %arg1[%c0, %c0_0] : memref<8x128xf32, #tpu.memory_space<vmem>>, vector<8x128xf32>
    %c0_1 = arith.constant 0 : index
    %c0_2 = arith.constant 0 : index
    %1 = vector.load %arg2[%c0_1, %c0_2] : memref<8x128xf32, #tpu.memory_space<vmem>>, vector<8x128xf32>
    %c0_3 = arith.constant 0 : index
    %c0_4 = arith.constant 0 : index
    %2 = vector.load %arg3[%c0_3, %c0_4] : memref<128x256xf32, #tpu.memory_space<vmem>>, vector<128x256xf32>
    %cst = arith.constant dense<0.000000e+00> : vector<8x256xf32>
    %3 = tpu.matmul %1, %2, %cst {dimension_numbers = #tpu.dot_dimension_numbers<[1], [0], [0], [1], [0, 0, 1, 1], [], []>} : vector<8x128xf32>, vector<128x256xf32>, vector<8x256xf32> -> vector<8x256xf32>
    %4 = vector.extract_strided_slice %3 {offsets = [0, 0], sizes = [8, 128], strides = [1, 1]} : vector<8x256xf32> to vector<8x128xf32>
    %5 = vector.extract_strided_slice %3 {offsets = [0, 128], sizes = [8, 128], strides = [1, 1]} : vector<8x256xf32> to vector<8x128xf32>
    %c0_5 = arith.constant 0 : index
    %c0_6 = arith.constant 0 : index
    %6 = vector.load %arg4[%c0_5, %c0_6] : memref<1x128xf32, #tpu.memory_space<vmem>>, vector<1x128xf32>
    %7 = vector.broadcast %6 : vector<1x128xf32> to vector<8x128xf32>
    %8 = arith.addf %7, %4 : vector<8x128xf32>
    %c0_7 = arith.constant 0 : index
    %c0_8 = arith.constant 0 : index
    %9 = vector.load %arg5[%c0_7, %c0_8] : memref<1x128xf32, #tpu.memory_space<vmem>>, vector<1x128xf32>
    %10 = vector.broadcast %9 : vector<1x128xf32> to vector<8x128xf32>
    %11 = arith.addf %10, %5 : vector<8x128xf32>
    %cst_9 = arith.constant dense<0.000000e+00> : vector<8xf32>
    %12 = vector.multi_reduction <add>, %0, %cst_9 [1] : vector<8x128xf32> to vector<8xf32>
    %13 = vector.shape_cast %12 : vector<8xf32> to vector<8x1xf32>
    %cst_10 = arith.constant 3.125000e-02 : f32
    %14 = vector.broadcast %cst_10 : f32 to vector<8x1xf32>
    %15 = arith.mulf %13, %14 : vector<8x1xf32>
    %16 = tpu.iota {dimensions = array<i32: 1>} : vector<8x128xi32>
    %c32_i32 = arith.constant 32 : i32
    %17 = vector.broadcast %c32_i32 : i32 to vector<8x128xi32>
    %18 = arith.cmpi slt, %16, %17 : vector<8x128xi32>
    %19 = vector.broadcast %15 : vector<8x1xf32> to vector<8x128xf32>
    %20 = arith.subf %0, %19 : vector<8x128xf32>
    %cst_11 = arith.constant 0.000000e+00 : f32
    %21 = vector.broadcast %cst_11 : f32 to vector<8x128xf32>
    %22 = arith.select %18, %20, %21 : vector<8x128xi1>, vector<8x128xf32>
    %23 = arith.mulf %22, %22 : vector<8x128xf32>
    %cst_12 = arith.constant dense<0.000000e+00> : vector<8xf32>
    %24 = vector.multi_reduction <add>, %23, %cst_12 [1] : vector<8x128xf32> to vector<8xf32>
    %25 = vector.shape_cast %24 : vector<8xf32> to vector<8x1xf32>
    %cst_13 = arith.constant 3.125000e-02 : f32
    %26 = vector.broadcast %cst_13 : f32 to vector<8x1xf32>
    %27 = arith.mulf %25, %26 : vector<8x1xf32>
    %cst_14 = arith.constant 9.99999996E-13 : f32
    %28 = vector.broadcast %cst_14 : f32 to vector<8x1xf32>
    %29 = arith.addf %27, %28 : vector<8x1xf32>
    %30 = math.rsqrt %29 : vector<8x1xf32>
    %31 = vector.broadcast %30 : vector<8x1xf32> to vector<8x128xf32>
    %32 = arith.mulf %22, %31 : vector<8x128xf32>
    %33 = arith.mulf %8, %32 : vector<8x128xf32>
    %34 = arith.addf %33, %11 : vector<8x128xf32>
    %c0_15 = arith.constant 0 : index
    %c0_16 = arith.constant 0 : index
    %35 = vector.load %arg6[%c0_15, %c0_16] : memref<8x128xf32, #tpu.memory_space<vmem>>, vector<8x128xf32>
    tpu.vector_store %arg6[%c0_15, %c0_16], %34 {strides = array<i32>} : memref<8x128xf32, #tpu.memory_space<vmem>>, vector<8x128xf32>,
    return
  }
  func.func @transform_0(%arg0: i32) -> (i32, i32) {
    %c0_i32 = arith.constant 0 : i32
    %c0_i32_0 = arith.constant 0 : i32
    return %arg0, %c0_i32 : i32, i32
  }
  func.func @transform_1(%arg0: i32) -> (i32, i32) {
    %c0_i32 = arith.constant 0 : i32
    %c0_i32_0 = arith.constant 0 : i32
    return %arg0, %c0_i32 : i32, i32
  }
  func.func @transform_2(%arg0: i32) -> (i32, i32) {
    %c0_i32 = arith.constant 0 : i32
    %c0_i32_0 = arith.constant 0 : i32
    %c0_i32_1 = arith.constant 0 : i32
    return %c0_i32, %c0_i32_0 : i32, i32
  }
  func.func @transform_3(%arg0: i32) -> (i32, i32) {
    %c0_i32 = arith.constant 0 : i32
    %c0_i32_0 = arith.constant 0 : i32
    %c0_i32_1 = arith.constant 0 : i32
    return %c0_i32, %c0_i32_0 : i32, i32
  }
  func.func @transform_4(%arg0: i32) -> (i32, i32) {
    %c0_i32 = arith.constant 0 : i32
    %c0_i32_0 = arith.constant 0 : i32
    %c0_i32_1 = arith.constant 0 : i32
    return %c0_i32, %c0_i32_0 : i32, i32
  }
  func.func @transform_5(%arg0: i32) -> (i32, i32) {
    %c0_i32 = arith.constant 0 : i32
    %c0_i32_0 = arith.constant 0 : i32
    return %arg0, %c0_i32 : i32, i32
  }
}

module attributes {stable_mosaic.version = 11 : i64} {
  func.func @_cln_kernel(%arg0: i32, %arg1: memref<8x128xf32, #tpu.memory_space<vmem>>, %arg2: memref<8x128xf32, #tpu.memory_space<vmem>>, %arg3: memref<128x256xf32, #tpu.memory_space<vmem>>, %arg4: memref<1x128xf32, #tpu.memory_space<vmem>>, %arg5: memref<1x128xf32, #tpu.memory_space<vmem>>, %arg6: memref<8x128xf32, #tpu.memory_space<vmem>>) attributes {dimension_semantics = [#tpu.dimension_semantics<parallel>], iteration_bounds = array<i64: 2>, scalar_prefetch = 0 : i64, scratch_operands = 0 : i64, tpu.core_type = #tpu.core_type<tc>, window_params = [{transform_indices = @transform_0, window_bounds = array<i64: 8, 128>}, {transform_indices = @transform_1, window_bounds = array<i64: 8, 128>}, {pipeline_mode = #tpu.pipeline_mode<synchronous>, transform_indices = @transform_2, window_bounds = array<i64: 128, 256>}, {pipeline_mode = #tpu.pipeline_mode<synchronous>, transform_indices = @transform_3, window_bounds = array<i64: 1, 128>}, {pipeline_mode = #tpu.pipeline_mode<synchronous>, transform_indices = @transform_4, window_bounds = array<i64: 1, 128>}, {transform_indices = @transform_5, window_bounds = array<i64: 8, 128>}]} {
    %c0 = arith.constant 0 : index
    %c0_0 = arith.constant 0 : index
    %0 = vector.load %arg1[%c0, %c0_0] : memref<8x128xf32, #tpu.memory_space<vmem>>, vector<8x128xf32>
    %c0_1 = arith.constant 0 : index
    %c0_2 = arith.constant 0 : index
    %1 = vector.load %arg2[%c0_1, %c0_2] : memref<8x128xf32, #tpu.memory_space<vmem>>, vector<8x128xf32>
    %c0_3 = arith.constant 0 : index
    %c0_4 = arith.constant 0 : index
    %2 = vector.load %arg3[%c0_3, %c0_4] : memref<128x256xf32, #tpu.memory_space<vmem>>, vector<128x256xf32>
    %cst = arith.constant dense<0.000000e+00> : vector<8x256xf32>
    %3 = tpu.matmul %1, %2, %cst {dimension_numbers = #tpu.dot_dimension_numbers<[1], [0], [0], [1], [0, 0, 1, 1], [], []>} : vector<8x128xf32>, vector<128x256xf32>, vector<8x256xf32> -> vector<8x256xf32>
    %4 = vector.extract_strided_slice %3 {offsets = [0, 0], sizes = [8, 128], strides = [1, 1]} : vector<8x256xf32> to vector<8x128xf32>
    %5 = vector.extract_strided_slice %3 {offsets = [0, 128], sizes = [8, 128], strides = [1, 1]} : vector<8x256xf32> to vector<8x128xf32>
    %c0_5 = arith.constant 0 : index
    %c0_6 = arith.constant 0 : index
    %6 = vector.load %arg4[%c0_5, %c0_6] : memref<1x128xf32, #tpu.memory_space<vmem>>, vector<1x128xf32>
    %7 = vector.broadcast %6 : vector<1x128xf32> to vector<8x128xf32>
    %8 = arith.addf %7, %4 : vector<8x128xf32>
    %c0_7 = arith.constant 0 : index
    %c0_8 = arith.constant 0 : index
    %9 = vector.load %arg5[%c0_7, %c0_8] : memref<1x128xf32, #tpu.memory_space<vmem>>, vector<1x128xf32>
    %10 = vector.broadcast %9 : vector<1x128xf32> to vector<8x128xf32>
    %11 = arith.addf %10, %5 : vector<8x128xf32>
    %cst_9 = arith.constant dense<0.000000e+00> : vector<8xf32>
    %12 = vector.multi_reduction <add>, %0, %cst_9 [1] : vector<8x128xf32> to vector<8xf32>
    %13 = vector.shape_cast %12 : vector<8xf32> to vector<8x1xf32>
    %cst_10 = arith.constant 3.125000e-02 : f32
    %14 = vector.broadcast %cst_10 : f32 to vector<8x1xf32>
    %15 = arith.mulf %13, %14 : vector<8x1xf32>
    %16 = tpu.iota {dimensions = array<i32: 1>} : vector<8x128xi32>
    %c32_i32 = arith.constant 32 : i32
    %17 = vector.broadcast %c32_i32 : i32 to vector<8x128xi32>
    %18 = arith.cmpi slt, %16, %17 : vector<8x128xi32>
    %19 = vector.broadcast %15 : vector<8x1xf32> to vector<8x128xf32>
    %20 = arith.subf %0, %19 : vector<8x128xf32>
    %cst_11 = arith.constant 0.000000e+00 : f32
    %21 = vector.broadcast %cst_11 : f32 to vector<8x128xf32>
    %22 = arith.select %18, %20, %21 : vector<8x128xi1>, vector<8x128xf32>
    %23 = arith.mulf %22, %22 : vector<8x128xf32>
    %cst_12 = arith.constant dense<0.000000e+00> : vector<8xf32>
    %24 = vector.multi_reduction <add>, %23, %cst_12 [1] : vector<8x128xf32> to vector<8xf32>
    %25 = vector.shape_cast %24 : vector<8xf32> to vector<8x1xf32>
    %cst_13 = arith.constant 3.125000e-02 : f32
    %26 = vector.broadcast %cst_13 : f32 to vector<8x1xf32>
    %27 = arith.mulf %25, %26 : vector<8x1xf32>
    %cst_14 = arith.constant 9.99999996E-13 : f32
    %28 = vector.broadcast %cst_14 : f32 to vector<8x1xf32>
    %29 = arith.addf %27, %28 : vector<8x1xf32>
    %30 = math.rsqrt %29 : vector<8x1xf32>
    %31 = vector.broadcast %30 : vector<8x1xf32> to vector<8x128xf32>
    %32 = arith.mulf %22, %31 : vector<8x128xf32>
    %33 = arith.mulf %8, %32 : vector<8x128xf32>
    %34 = arith.addf %33, %11 : vector<8x128xf32>
    %c0_15 = arith.constant 0 : index
    %c0_16 = arith.constant 0 : index
    %35 = vector.load %arg6[%c0_15, %c0_16] : memref<8x128xf32, #tpu.memory_space<vmem>>, vector<8x128xf32>
    tpu.vector_store %arg6[%c0_15, %c0_16], %34 {strides = array<i32>} : memref<8x128xf32, #tpu.memory_space<vmem>>, vector<8x128xf32>,
    return
  }
  func.func @transform_0(%arg0: i32) -> (i32, i32) {
    %c0_i32 = arith.constant 0 : i32
    %c0_i32_0 = arith.constant 0 : i32
    return %arg0, %c0_i32 : i32, i32
  }
  func.func @transform_1(%arg0: i32) -> (i32, i32) {
    %c0_i32 = arith.constant 0 : i32
    %c0_i32_0 = arith.constant 0 : i32
    return %arg0, %c0_i32 : i32, i32
  }
  func.func @transform_2(%arg0: i32) -> (i32, i32) {
    %c0_i32 = arith.constant 0 : i32
    %c0_i32_0 = arith.constant 0 : i32
    %c0_i32_1 = arith.constant 0 : i32
    return %c0_i32, %c0_i32_0 : i32, i32
  }
  func.func @transform_3(%arg0: i32) -> (i32, i32) {
    %c0_i32 = arith.constant 0 : i32
    %c0_i32_0 = arith.constant 0 : i32
    %c0_i32_1 = arith.constant 0 : i32
    return %c0_i32, %c0_i32_0 : i32, i32
  }
  func.func @transform_4(%arg0: i32) -> (i32, i32) {
    %c0_i32 = arith.constant 0 : i32
    %c0_i32_0 = arith.constant 0 : i32
    %c0_i32_1 = arith.constant 0 : i32
    return %c0_i32, %c0_i32_0 : i32, i32
  }
  func.func @transform_5(%arg0: i32) -> (i32, i32) {
    %c0_i32 = arith.constant 0 : i32
    %c0_i32_0 = arith.constant 0 : i32
    return %arg0, %c0_i32 : i32, i32
  }
}

</mosaic_0001>

<llo_original>
// kernel: tpu_custom_call.1
$region0: #{tpu_custom_call.1}
  #allocation0 [shape = 'u32[]', space=smem, size = 0x4, offset = 0x4, fixed_abs, tag = 'smem constant byte address 0x4 - core index']
  #allocation1 [shape = 'u32[144,128]{1,0:T(1,128)}', space=vmem, size = 0x12000, scoped, tag = 'internal scratch']
  %s0 = inlined_call_operand.hbm [shape: f32[16,128], index: 0, kind: input, shape index: {}]
  %s1 = inlined_call_operand.hbm [shape: f32[16,128], index: 1, kind: input, shape index: {}]
  %s2 = inlined_call_operand.hbm [shape: f32[128,256], index: 2, kind: input, shape index: {}]
  %s3 = inlined_call_operand.vmem [shape: f32[1,128], index: 3, kind: input, shape index: {}]
  %s4 = inlined_call_operand.vmem [shape: f32[1,128], index: 4, kind: input, shape index: {}]
  %s5 = inlined_call_operand.hbm [shape: f32[16,128], index: 5, kind: output, shape index: {}]
  %s6 = sld [smem:[#allocation0]]
  $region65: #{tpu_custom_call.1} parent=0
    _
  %s8 = ssub.s32 1, %s6
  %s9 = scalar_select 0, %s8, %s6
  $region1: #{tpu_custom_call.1} parent=0
    #allocation2 [shape = 'u8[8192]{0}', space=vmem, size = 0x2000, scoped, tag = 'input window, operand 0']
    #allocation3 [shape = 's32[2]{0}', space=sflag, size = 0x8, scoped, tag = 'scoped memory for tpu_custom_call.1']
    #allocation4 [shape = 's32[2]{0}', space=sflag, size = 0x8, scoped, tag = 'scoped memory for tpu_custom_call.1']
    #allocation5 [shape = 'u8[8192]{0}', space=vmem, size = 0x2000, scoped, tag = 'input window, operand 1']
    #allocation6 [shape = 's32[2]{0}', space=sflag, size = 0x8, scoped, tag = 'scoped memory for tpu_custom_call.1']
    #allocation7 [shape = 'u8[131072]{0}', space=vmem, size = 0x20000, scoped, tag = 'input window, operand 2, single buffered']
    #allocation8 [shape = 'u8[8192]{0}', space=vmem, size = 0x2000, scoped, tag = 'output window, operand 0']
    %10 = vsyncpa [#allocation3], 0
    %s11 = scalar_lea.sflag [#allocation3], 1
    %12 = vsyncpa %s11, 0
    %13 = vsyncpa [#allocation6], 0
    %s14 = scalar_lea.sflag [#allocation6], 1
    %15 = vsyncpa %s14, 0
    %16 = vsyncpa [#allocation4], 0
    %s17 = scalar_lea.sflag [#allocation4], 1
    %18 = vsyncpa %s17, 0
    loop: start=0, step=1, limit=4
    $region2: #{tpu_custom_call.1} parent=1 // loop_pre_header
      _
    $region3: #{tpu_custom_call.1} parent=1 // loop_header
      %s20 = sphi 0, %s24
      %p21 = scmp.ge.s32.totalorder %s20, 4
      %s30 = sphi 0, %s32
      %s33 = sphi 0, %s30
      %s34 = sphi 0, %s33
      %s50 = sphi 0, %s34
      %s56 = sphi 0, %s58
      %s59 = sphi 0, %s56
      %s60 = sphi 0, %s59
      %s76 = sphi 0, %s60
      %s80 = sphi 0, %s80
      %s82 = sphi 0, %s80
      %s83 = sphi 0, %s82
      %s97 = sphi 0, %s83
      %s101 = sphi 0, %s101
      %s103 = sphi 0, %s101
      %s104 = sphi 0, %s103
      %s118 = sphi 0, %s104
      %s122 = sphi 0, %s122
      %s124 = sphi 0, %s122
      %s125 = sphi 0, %s124
      %s139 = sphi 0, %s125
      %s145 = sphi 0, %s147
      %s148 = sphi 0, %s145
      %s149 = sphi 0, %s148
      %s165 = sphi 0, %s149
    $region4: #{tpu_custom_call.1} parent=1 // loop_header_branch
      %23 = sbr.rel (%p21) target = $region8
    $region5: #{tpu_custom_call.1} parent=1 // loop_body
      %s25 = ssub.s32 %s20, 1
      %s26 = ssub.s32 %s20, 2
      %s27 = sadd.s32 %s20, 1
      %s28 = ssub.s32 %s20, %s27
      %p29 = scmp.eq.s32.totalorder %s28, 0
      %s31 = sadd.s32 %s30, 1
      %s32 = scalar_select %p29, %s30, %s31
      %p35 = pneg %p29
      %p36 = scmp.eq.s32.totalorder %s20, 1
      %p37 = por %p35, %p36
      %p38 = scmp.ne.s32.totalorder %s30, %s33
      %p39 = scmp.eq.s32.totalorder %s20, 0
      %p40 = por %p38, %p39
      %p41 = scmp.ne.s32.totalorder %s30, %s33
      %p42 = scmp.eq.s32.totalorder %s25, 1
      %p43 = por %p41, %p42
      %p44 = scmp.ne.s32.totalorder %s33, %s34
      %p45 = scmp.eq.s32.totalorder %s25, 0
      %p46 = por %p44, %p45
      %p47 = scmp.ne.s32.totalorder %s33, %s34
      %p48 = scmp.eq.s32.totalorder %s26, 1
      %p49 = por %p47, %p48
      %p51 = scmp.ne.s32.totalorder %s34, %s50
      %p52 = scmp.eq.s32.totalorder %s26, 0
      %p53 = por %p51, %p52
      %s54 = ssub.s32 %s20, %s27
      %p55 = scmp.eq.s32.totalorder %s54, 0
      %s57 = sadd.s32 %s56, 1
      %s58 = scalar_select %p55, %s56, %s57
      %p61 = pneg %p55
      %p62 = scmp.eq.s32.totalorder %s20, 1
      %p63 = por %p61, %p62
      %p64 = scmp.ne.s32.totalorder %s56, %s59
      %p65 = scmp.eq.s32.totalorder %s20, 0
      %p66 = por %p64, %p65
      %p67 = scmp.ne.s32.totalorder %s56, %s59
      %p68 = scmp.eq.s32.totalorder %s25, 1
      %p69 = por %p67, %p68
      %p70 = scmp.ne.s32.totalorder %s59, %s60
      %p71 = scmp.eq.s32.totalorder %s25, 0
      %p72 = por %p70, %p71
      %p73 = scmp.ne.s32.totalorder %s59, %s60
      %p74 = scmp.eq.s32.totalorder %s26, 1
      %p75 = por %p73, %p74
      %p77 = scmp.ne.s32.totalorder %s60, %s76
      %p78 = scmp.eq.s32.totalorder %s26, 0
      %p79 = por %p77, %p78
      %s81 = sadd.s32 %s80, 1
      %p84 = scmp.eq.s32.totalorder %s20, 1
      %p85 = scmp.ne.s32.totalorder %s80, %s82
      %p86 = scmp.eq.s32.totalorder %s20, 0
      %p87 = por %p85, %p86
      %p88 = scmp.ne.s32.totalorder %s80, %s82
      %p89 = scmp.eq.s32.totalorder %s25, 1
      %p90 = por %p88, %p89
      %p91 = scmp.ne.s32.totalorder %s82, %s83
      %p92 = scmp.eq.s32.totalorder %s25, 0
      %p93 = por %p91, %p92
      %p94 = scmp.ne.s32.totalorder %s82, %s83
      %p95 = scmp.eq.s32.totalorder %s26, 1
      %p96 = por %p94, %p95
      %p98 = scmp.ne.s32.totalorder %s83, %s97
      %p99 = scmp.eq.s32.totalorder %s26, 0
      %p100 = por %p98, %p99
      %s102 = sadd.s32 %s101, 1
      %p105 = scmp.eq.s32.totalorder %s20, 1
      %p106 = scmp.ne.s32.totalorder %s101, %s103
      %p107 = scmp.eq.s32.totalorder %s20, 0
      %p108 = por %p106, %p107
      %p109 = scmp.ne.s32.totalorder %s101, %s103
      %p110 = scmp.eq.s32.totalorder %s25, 1
      %p111 = por %p109, %p110
      %p112 = scmp.ne.s32.totalorder %s103, %s104
      %p113 = scmp.eq.s32.totalorder %s25, 0
      %p114 = por %p112, %p113
      %p115 = scmp.ne.s32.totalorder %s103, %s104
      %p116 = scmp.eq.s32.totalorder %s26, 1
      %p117 = por %p115, %p116
      %p119 = scmp.ne.s32.totalorder %s104, %s118
      %p120 = scmp.eq.s32.totalorder %s26, 0
      %p121 = por %p119, %p120
      %s123 = sadd.s32 %s122, 1
      %p126 = scmp.eq.s32.totalorder %s20, 1
      %p127 = scmp.ne.s32.totalorder %s122, %s124
      %p128 = scmp.eq.s32.totalorder %s20, 0
      %p129 = por %p127, %p128
      %p130 = scmp.ne.s32.totalorder %s122, %s124
      %p131 = scmp.eq.s32.totalorder %s25, 1
      %p132 = por %p130, %p131
      %p133 = scmp.ne.s32.totalorder %s124, %s125
      %p134 = scmp.eq.s32.totalorder %s25, 0
      %p135 = por %p133, %p134
      %p136 = scmp.ne.s32.totalorder %s124, %s125
      %p137 = scmp.eq.s32.totalorder %s26, 1
      %p138 = por %p136, %p137
      %p140 = scmp.ne.s32.totalorder %s125, %s139
      %p141 = scmp.eq.s32.totalorder %s26, 0
      %p142 = por %p140, %p141
      %s143 = ssub.s32 %s20, %s27
      %p144 = scmp.eq.s32.totalorder %s143, 0
      %s146 = sadd.s32 %s145, 1
      %s147 = scalar_select %p144, %s145, %s146
      %p150 = pneg %p144
      %p151 = scmp.eq.s32.totalorder %s20, 1
      %p152 = por %p150, %p151
      %p153 = scmp.ne.s32.totalorder %s145, %s148
      %p154 = scmp.eq.s32.totalorder %s20, 0
      %p155 = por %p153, %p154
      %p156 = scmp.ne.s32.totalorder %s145, %s148
      %p157 = scmp.eq.s32.totalorder %s25, 1
      %p158 = por %p156, %p157
      %p159 = scmp.ne.s32.totalorder %s148, %s149
      %p160 = scmp.eq.s32.totalorder %s25, 0
      %p161 = por %p159, %p160
      %p162 = scmp.ne.s32.totalorder %s148, %s149
      %p163 = scmp.eq.s32.totalorder %s26, 1
      %p164 = por %p162, %p163
      %p166 = scmp.ne.s32.totalorder %s149, %s165
      %p167 = scmp.eq.s32.totalorder %s26, 0
      %p168 = por %p166, %p167
      %p169 = scmp.le.s32.totalorder 1, %s20
      %p170 = scmp.lt.s32.totalorder %s20, 3
      %p171 = pnand %p169, %p170
      %p172 = pneg %p171
      // Predicated region
      $region9: #{tpu_custom_call.1} parent=5 // pred_check
        _
      $region10: #{tpu_custom_call.1} parent=5 // pred_check_branch
        %174 = sbr.rel (%p171) target = $region12
      $region11: #{tpu_custom_call.1} parent=5 // pred_region
        %s175 = ssub.s32 %s20, 1
        // Predicated region
        $region13: #{tpu_custom_call.1} parent=11 // pred_check
          %p176 = pneg %p93
        $region14: #{tpu_custom_call.1} parent=11 // pred_check_branch
          %178 = sbr.rel (%p176) target = $region16
        $region15: #{tpu_custom_call.1} parent=11 // pred_region
          %s180 = ssub.s32 4096, 4096
          %181 = vsyncadd [#allocation6], %s180
          %s182 = sshll.u32 [#allocation7], 4
          %s183 = int_to_ptr.vmem [resolvable:$true] %s182
          %188 = dma.hbm_to_vmem [thread:$0]  %s2, 4096, %s183, [#allocation6], 256, 256, 16
        $region16: #{tpu_custom_call.1} parent=11 // pred_fallthru
          _
        // Predicated region
        $region17: #{tpu_custom_call.1} parent=11 // pred_check
          %p189 = pneg %p114
        $region18: #{tpu_custom_call.1} parent=11 // pred_check_branch
          %191 = sbr.rel (%p189) target = $region20
        $region19: #{tpu_custom_call.1} parent=11 // pred_region
          _
        $region20: #{tpu_custom_call.1} parent=11 // pred_fallthru
          _
        // Predicated region
        $region21: #{tpu_custom_call.1} parent=11 // pred_check
          %p192 = pneg %p135
        $region22: #{tpu_custom_call.1} parent=11 // pred_check_branch
          %194 = sbr.rel (%p192) target = $region24
        $region23: #{tpu_custom_call.1} parent=11 // pred_region
          _
        $region24: #{tpu_custom_call.1} parent=11 // pred_fallthru
          _
      $region12: #{tpu_custom_call.1} parent=5 // pred_fallthru
        _
      %p195 = scmp.lt.s32.totalorder %s20, 2
      // Predicated region
      $region25: #{tpu_custom_call.1} parent=5 // pred_check
        %p196 = pneg %p195
      $region26: #{tpu_custom_call.1} parent=5 // pred_check_branch
        %198 = sbr.rel (%p196) target = $region28
      $region27: #{tpu_custom_call.1} parent=5 // pred_region
        // Predicated region
        $region29: #{tpu_custom_call.1} parent=27 // pred_check
          %p199 = pneg %p40
        $region30: #{tpu_custom_call.1} parent=27 // pred_check_branch
          %201 = sbr.rel (%p199) target = $region32
        $region31: #{tpu_custom_call.1} parent=27 // pred_region
          %s202 = sand.u32 %s30, 1
          %s203 = scalar_lea.sflag [#allocation3], %s202
          %s204 = sand.u32 %s30, 1
          %s205 = smul.addr %s204, 8
          %s206 = scalar_lea.vmem [#allocation2], %s205
          %s208 = ssub.s32 128, 128
          %209 = vsyncadd %s203, %s208
          %s210 = smul.addr %s20, 128
          %s211 = scalar_lea.hbm %s0, %s210
          %s213 = sshll.u32 %s206, 4
          %s214 = int_to_ptr.vmem [resolvable:$true] %s213
          %216 = dma.hbm_to_vmem [thread:$0]  %s211, 128, %s214, %s203
        $region32: #{tpu_custom_call.1} parent=27 // pred_fallthru
          _
        // Predicated region
        $region33: #{tpu_custom_call.1} parent=27 // pred_check
          %p217 = pneg %p66
        $region34: #{tpu_custom_call.1} parent=27 // pred_check_branch
          %219 = sbr.rel (%p217) target = $region36
        $region35: #{tpu_custom_call.1} parent=27 // pred_region
          %s220 = sand.u32 %s20, 1
          %s221 = scalar_lea.sflag [#allocation6], %s220
          %s222 = sand.u32 %s56, 1
          %s223 = smul.addr %s222, 8
          %s224 = scalar_lea.vmem [#allocation5], %s223
          %s226 = ssub.s32 128, 128
          %227 = vsyncadd %s221, %s226
          %s228 = smul.addr %s20, 128
          %s229 = scalar_lea.hbm %s1, %s228
          %s231 = sshll.u32 %s224, 4
          %s232 = int_to_ptr.vmem [resolvable:$true] %s231
          %234 = dma.hbm_to_vmem [thread:$0]  %s229, 128, %s232, %s221
        $region36: #{tpu_custom_call.1} parent=27 // pred_fallthru
          _
      $region28: #{tpu_custom_call.1} parent=5 // pred_fallthru
        _
      %p235 = scmp.le.s32.totalorder 1, %s20
      %p236 = scmp.lt.s32.totalorder %s20, 3
      %p237 = pnand %p235, %p236
      %p238 = pneg %p237
      // Predicated region
      $region37: #{tpu_custom_call.1} parent=5 // pred_check
        _
      $region38: #{tpu_custom_call.1} parent=5 // pred_check_branch
        %240 = sbr.rel (%p237) target = $region40
      $region39: #{tpu_custom_call.1} parent=5 // pred_region
        %s241 = ssub.s32 %s20, 1
        %s242 = sand.u32 %s33, 1
        %s243 = scalar_lea.sflag [#allocation3], %s242
        %s244 = sand.u32 %s33, 1
        %s245 = smul.addr %s244, 8
        %s246 = scalar_lea.vmem [#allocation2], %s245
        // Predicated region
        $region41: #{tpu_custom_call.1} parent=39 // pred_check
          %p247 = pneg %p46
        $region42: #{tpu_custom_call.1} parent=39 // pred_check_branch
          %249 = sbr.rel (%p247) target = $region44
        $region43: #{tpu_custom_call.1} parent=39 // pred_region
          %250 = dma.done %s243, 128
        $region44: #{tpu_custom_call.1} parent=39 // pred_fallthru
          _
        %s251 = sand.u32 %s25, 1
        %s252 = scalar_lea.sflag [#allocation6], %s251
        %s253 = sand.u32 %s59, 1
        %s254 = smul.addr %s253, 8
        %s255 = scalar_lea.vmem [#allocation5], %s254
        // Predicated region
        $region45: #{tpu_custom_call.1} parent=39 // pred_check
          %p256 = pneg %p72
        $region46: #{tpu_custom_call.1} parent=39 // pred_check_branch
          %258 = sbr.rel (%p256) target = $region48
        $region47: #{tpu_custom_call.1} parent=39 // pred_region
          %259 = dma.done %s252, 128
        $region48: #{tpu_custom_call.1} parent=39 // pred_fallthru
          _
        // Predicated region
        $region49: #{tpu_custom_call.1} parent=39 // pred_check
          %p260 = pneg %p93
        $region50: #{tpu_custom_call.1} parent=39 // pred_check_branch
          %262 = sbr.rel (%p260) target = $region52
        $region51: #{tpu_custom_call.1} parent=39 // pred_region
          %263 = dma.done [#allocation6], 4096
        $region52: #{tpu_custom_call.1} parent=39 // pred_fallthru
          _
        %s264 = sand.u32 %s33, 1
        %s265 = scalar_lea.sflag [#allocation3], %s264
        %s266 = sand.u32 %s33, 1
        %s267 = smul.addr %s266, 8
        %s268 = scalar_lea.vmem [#allocation2], %s267
        %p269 = pneg %p46
        %p270 = pneg %p43
        %s271 = sand.u32 %s25, 1
        %s272 = scalar_lea.sflag [#allocation6], %s271
        %s273 = sand.u32 %s59, 1
        %s274 = smul.addr %s273, 8
        %s275 = scalar_lea.vmem [#allocation5], %s274
        %p276 = pneg %p72
        %p277 = pneg %p69
        %p278 = pneg %p93
        %p279 = pneg %p90
        %p280 = pneg %p114
        %p281 = pneg %p111
        %p282 = pneg %p135
        %p283 = pneg %p132
        %p284 = pneg %p161
        %p285 = pneg %p158
        %s286 = sand.u32 %s148, 1
        %s287 = scalar_lea.sflag [#allocation4], %s286
        %s288 = sand.u32 %s148, 1
        %s289 = smul.addr %s288, 8
        %s290 = scalar_lea.vmem [#allocation8], %s289
        %v291 = vld [vmem:[%s246] sm:$0xff]
        %v292 = vld [vmem:[%s255] sm:$0xff]
        %v293 = vld [vmem:[#allocation7] sm:$0xff]
        %v294 = vld [vmem:[#allocation7 + $0x8] sm:$0xff]
        %v295 = vld [vmem:[#allocation7 + $0x10] sm:$0xff]
        %v296 = vld [vmem:[#allocation7 + $0x18] sm:$0xff]
        %v297 = vld [vmem:[#allocation7 + $0x20] sm:$0xff]
        %v298 = vld [vmem:[#allocation7 + $0x28] sm:$0xff]
        %v299 = vld [vmem:[#allocation7 + $0x30] sm:$0xff]
        %v300 = vld [vmem:[#allocation7 + $0x38] sm:$0xff]
        %v301 = vld [vmem:[#allocation7 + $0x40] sm:$0xff]
        %v302 = vld [vmem:[#allocation7 + $0x48] sm:$0xff]
        %v303 = vld [vmem:[#allocation7 + $0x50] sm:$0xff]
        %v304 = vld [vmem:[#allocation7 + $0x58] sm:$0xff]
        %v305 = vld [vmem:[#allocation7 + $0x60] sm:$0xff]
        %v306 = vld [vmem:[#allocation7 + $0x68] sm:$0xff]
        %v307 = vld [vmem:[#allocation7 + $0x70] sm:$0xff]
        %v308 = vld [vmem:[#allocation7 + $0x78] sm:$0xff]
        %v309 = vld [vmem:[#allocation7 + $0x80] sm:$0xff]
        %v310 = vld [vmem:[#allocation7 + $0x88] sm:$0xff]
        %v311 = vld [vmem:[#allocation7 + $0x90] sm:$0xff]
        %v312 = vld [vmem:[#allocation7 + $0x98] sm:$0xff]
        %v313 = vld [vmem:[#allocation7 + $0xa0] sm:$0xff]
        %v314 = vld [vmem:[#allocation7 + $0xa8] sm:$0xff]
        %v315 = vld [vmem:[#allocation7 + $0xb0] sm:$0xff]
        %v316 = vld [vmem:[#allocation7 + $0xb8] sm:$0xff]
        %v317 = vld [vmem:[#allocation7 + $0xc0] sm:$0xff]
        %v318 = vld [vmem:[#allocation7 + $0xc8] sm:$0xff]
        %v319 = vld [vmem:[#allocation7 + $0xd0] sm:$0xff]
        %v320 = vld [vmem:[#allocation7 + $0xd8] sm:$0xff]
        %v321 = vld [vmem:[#allocation7 + $0xe0] sm:$0xff]
        %v322 = vld [vmem:[#allocation7 + $0xe8] sm:$0xff]
        %v323 = vld [vmem:[#allocation7 + $0xf0] sm:$0xff]
        %v324 = vld [vmem:[#allocation7 + $0xf8] sm:$0xff]
        %325 = vmatprep.subr.mxu0 %v324
        %326 = vmatpush1.msra.mxu0 %v323
        %327 = vmatprep.subr.mxu0 %v322
        %328 = vmatpush1.msra.mxu0 %v321
        %329 = vmatprep.subr.mxu0 %v320
        %330 = vmatpush1.msra.mxu0 %v319
        %331 = vmatprep.subr.mxu0 %v318
        %332 = vmatpush1.msra.mxu0 %v317
        %333 = vmatprep.subr.mxu0 %v316
        %334 = vmatpush1.msra.mxu0 %v315
        %335 = vmatprep.subr.mxu0 %v314
        %336 = vmatpush1.msra.mxu0 %v313
        %337 = vmatprep.subr.mxu0 %v312
        %338 = vmatpush1.msra.mxu0 %v311
        %339 = vmatprep.subr.mxu0 %v310
        %340 = vmatpush1.msra.mxu0 %v309
        %341 = vmatprep.subr.mxu0 %v308
        %342 = vmatpush1.msra.mxu0 %v307
        %343 = vmatprep.subr.mxu0 %v306
        %344 = vmatpush1.msra.mxu0 %v305
        %345 = vmatprep.subr.mxu0 %v304
        %346 = vmatpush1.msra.mxu0 %v303
        %347 = vmatprep.subr.mxu0 %v302
        %348 = vmatpush1.msra.mxu0 %v301
        %349 = vmatprep.subr.mxu0 %v300
        %350 = vmatpush1.msra.mxu0 %v299
        %351 = vmatprep.subr.mxu0 %v298
        %352 = vmatpush1.msra.mxu0 %v297
        %353 = vmatprep.subr.mxu0 %v296
        %354 = vmatpush1.msra.mxu0 %v295
        %355 = vmatprep.subr.mxu0 %v294
        %356 = vmatpush1.msra.mxu0 %v293
        %357 = vmatprep.subr.mxu0 0.0
        %358 = vmatpush2.msra.mxu0 0.0
        %359 = vmatprep.subr.mxu0 0.0
        %360 = vmatpush2.msra.mxu0 0.0
        %361 = vmatprep.subr.mxu0 0.0
        %362 = vmatpush2.msra.mxu0 0.0
        %363 = vmatprep.subr.mxu0 0.0
        %364 = vmatpush2.msra.mxu0 0.0
        %365 = vmatprep.subr.mxu0 0.0
        %366 = vmatpush2.msra.mxu0 0.0
        %367 = vmatprep.subr.mxu0 0.0
        %368 = vmatpush2.msra.mxu0 0.0
        %369 = vmatprep.subr.mxu0 0.0
        %370 = vmatpush2.msra.mxu0 0.0
        %371 = vmatprep.subr.mxu0 0.0
        %372 = vmatpush2.msra.mxu0 0.0
        %373 = vmatprep.subr.mxu0 0.0
        %374 = vmatpush2.msra.mxu0 0.0
        %375 = vmatprep.subr.mxu0 0.0
        %376 = vmatpush2.msra.mxu0 0.0
        %377 = vmatprep.subr.mxu0 0.0
        %378 = vmatpush2.msra.mxu0 0.0
        %379 = vmatprep.subr.mxu0 0.0
        %380 = vmatpush2.msra.mxu0 0.0
        %381 = vmatprep.subr.mxu0 0.0
        %382 = vmatpush2.msra.mxu0 0.0
        %383 = vmatprep.subr.mxu0 0.0
        %384 = vmatpush2.msra.mxu0 0.0
        %385 = vmatprep.subr.mxu0 0.0
        %386 = vmatpush2.msra.mxu0 0.0
        %387 = vmatprep.subr.mxu0 0.0
        %388 = vmatpush2.msra.mxu0 0.0
        %389 = vmatprep.mubr.f32.mxu0 0.0
        %390 = vmatmul.mubr.f32.gmra.mxu0 %v292
        %v391 = vpop.f32.mrf.mxu0
        %v392 = vadd.f32 0.0, %v391
        %v393 = vpop.f32.mrf.mxu0
        %v394 = vadd.f32 0.0, %v393
        %395 = vdwg.mxu0
        %v396 = vld [vmem:[%s3] sm:$0x1]
        %v398 = vlaneseq
        %v399 = vshrl.u32 %v398, 7
        %v400 = vsub.s32 0, %v399
        %v401 = vrot.slane %v396, %v400
        %v403 = vadd.f32 %v401, %v392
        %v404 = vld [vmem:[%s4] sm:$0x1]
        %v406 = vlaneseq
        %v407 = vshrl.u32 %v406, 7
        %v408 = vsub.s32 0, %v407
        %v409 = vrot.slane %v404, %v408
        %v411 = vadd.f32 %v409, %v394
        %412 = vadd.xlane.f32.xlu0 %v291
        %v413 = vpop.xlane.xlu0 %412
        %v414 = vmul.f32 %v413, 0.03125
        %v415 = vlaneseq
        %v416 = vand.u32 %v415, 127
        %vm417 = vcmp.lt.s32.totalorder %v416, 32
        %v418 = vsub.f32 %v291, %v414
        %v419 = vsel %vm417, %v418, 0.0
        %v420 = vmul.f32 %v419, %v419
        %421 = vadd.xlane.f32.xlu0 %v420
        %v422 = vpop.xlane.xlu0 %421
        %v423 = vmul.f32 %v422, 0.03125
        %v424 = vadd.f32 %v423, 1e-12
        %v425 = vrsqrt.pop %v424
        %v426 = vmul.f32 %v419, %v425
        %v427 = vmul.f32 %v403, %v426
        %v428 = vadd.f32 %v427, %v411
        %429 = vst [vmem:[%s290] sm:$0xff] %v428
        %s430 = sand.u32 %s148, 1
        %s431 = scalar_lea.sflag [#allocation4], %s430
        %s432 = sand.u32 %s148, 1
        %s433 = smul.addr %s432, 8
        %s434 = scalar_lea.vmem [#allocation8], %s433
        // Predicated region
        $region53: #{tpu_custom_call.1} parent=39 // pred_check
          %p435 = pneg %p158
        $region54: #{tpu_custom_call.1} parent=39 // pred_check_branch
          %437 = sbr.rel (%p435) target = $region56
        $region55: #{tpu_custom_call.1} parent=39 // pred_region
          %s439 = ssub.s32 128, 128
          %440 = vsyncadd %s431, %s439
          %s441 = smul.addr %s25, 128
          %s442 = scalar_lea.hbm %s5, %s441
          %s444 = sshll.u32 %s434, 4
          %s445 = int_to_ptr.vmem [resolvable:$true] %s444
          %447 = dma.vmem_to_hbm [thread:$0]  %s445, 128, %s442, %s431
        $region56: #{tpu_custom_call.1} parent=39 // pred_fallthru
          _
      $region40: #{tpu_custom_call.1} parent=5 // pred_fallthru
        _
      %p448 = scmp.le.s32.totalorder 2, %s20
      // Predicated region
      $region57: #{tpu_custom_call.1} parent=5 // pred_check
        %p449 = pneg %p448
      $region58: #{tpu_custom_call.1} parent=5 // pred_check_branch
        %451 = sbr.rel (%p449) target = $region60
      $region59: #{tpu_custom_call.1} parent=5 // pred_region
        %s452 = ssub.s32 %s20, 2
        // Predicated region
        $region61: #{tpu_custom_call.1} parent=59 // pred_check
          %p453 = pneg %p164
        $region62: #{tpu_custom_call.1} parent=59 // pred_check_branch
          %455 = sbr.rel (%p453) target = $region64
        $region63: #{tpu_custom_call.1} parent=59 // pred_region
          %s456 = sand.u32 %s149, 1
          %s457 = scalar_lea.sflag [#allocation4], %s456
          %s458 = sand.u32 %s149, 1
          %s459 = smul.addr %s458, 8
          %s460 = scalar_lea.vmem [#allocation8], %s459
          %461 = dma.done %s457, 128
        $region64: #{tpu_custom_call.1} parent=59 // pred_fallthru
          _
      $region60: #{tpu_custom_call.1} parent=5 // pred_fallthru
        _
    $region6: #{tpu_custom_call.1} parent=1 // loop_footer
      %s24 = sadd.s32 1, %s20
    $region7: #{tpu_custom_call.1} parent=1 // loop_footer_branch
      %19 = sbr.rel target = $region3
    $region8: #{tpu_custom_call.1} parent=1 // loop_exit
      _
    %462 = vsyncpa [#allocation3], 1
    %s463 = scalar_lea.sflag [#allocation3], 1
    %464 = vsyncpa %s463, 1
    %465 = vsyncpa [#allocation6], 1
    %s466 = scalar_lea.sflag [#allocation6], 1
    %467 = vsyncpa %s466, 1
    %468 = vsyncpa [#allocation4], 1
    %s469 = scalar_lea.sflag [#allocation4], 1
    %470 = vsyncpa %s469, 1

// kernel: tpu_custom_call.1
$region0: #{tpu_custom_call.1}
  #allocation0 [shape = 'u32[]', space=smem, size = 0x4, offset = 0x4, fixed_abs, tag = 'smem constant byte address 0x4 - core index']
  #allocation1 [shape = 'u32[144,128]{1,0:T(1,128)}', space=vmem, size = 0x12000, scoped, tag = 'internal scratch']
  %s0 = inlined_call_operand.hbm [shape: f32[16,128], index: 0, kind: input, shape index: {}]
  %s1 = inlined_call_operand.hbm [shape: f32[16,128], index: 1, kind: input, shape index: {}]
  %s2 = inlined_call_operand.hbm [shape: f32[128,256], index: 2, kind: input, shape index: {}]
  %s3 = inlined_call_operand.vmem [shape: f32[1,128], index: 3, kind: input, shape index: {}]
  %s4 = inlined_call_operand.vmem [shape: f32[1,128], index: 4, kind: input, shape index: {}]
  %s5 = inlined_call_operand.hbm [shape: f32[16,128], index: 5, kind: output, shape index: {}]
  %s6 = sld [smem:[#allocation0]]
  $region65: #{tpu_custom_call.1} parent=0
    _
  %s8 = ssub.s32 1, %s6
  %s9 = scalar_select 0, %s8, %s6
  $region1: #{tpu_custom_call.1} parent=0
    #allocation2 [shape = 'u8[8192]{0}', space=vmem, size = 0x2000, scoped, tag = 'input window, operand 0']
    #allocation3 [shape = 's32[2]{0}', space=sflag, size = 0x8, scoped, tag = 'scoped memory for tpu_custom_call.1']
    #allocation4 [shape = 's32[2]{0}', space=sflag, size = 0x8, scoped, tag = 'scoped memory for tpu_custom_call.1']
    #allocation5 [shape = 'u8[8192]{0}', space=vmem, size = 0x2000, scoped, tag = 'input window, operand 1']
    #allocation6 [shape = 's32[2]{0}', space=sflag, size = 0x8, scoped, tag = 'scoped memory for tpu_custom_call.1']
    #allocation7 [shape = 'u8[131072]{0}', space=vmem, size = 0x20000, scoped, tag = 'input window, operand 2, single buffered']
    #allocation8 [shape = 'u8[8192]{0}', space=vmem, size = 0x2000, scoped, tag = 'output window, operand 0']
    %10 = vsyncpa [#allocation3], 0
    %s11 = scalar_lea.sflag [#allocation3], 1
    %12 = vsyncpa %s11, 0
    %13 = vsyncpa [#allocation6], 0
    %s14 = scalar_lea.sflag [#allocation6], 1
    %15 = vsyncpa %s14, 0
    %16 = vsyncpa [#allocation4], 0
    %s17 = scalar_lea.sflag [#allocation4], 1
    %18 = vsyncpa %s17, 0
    loop: start=0, step=1, limit=4
    $region2: #{tpu_custom_call.1} parent=1 // loop_pre_header
      _
    $region3: #{tpu_custom_call.1} parent=1 // loop_header
      %s20 = sphi 0, %s24
      %p21 = scmp.ge.s32.totalorder %s20, 4
      %s30 = sphi 0, %s32
      %s33 = sphi 0, %s30
      %s34 = sphi 0, %s33
      %s50 = sphi 0, %s34
      %s56 = sphi 0, %s58
      %s59 = sphi 0, %s56
      %s60 = sphi 0, %s59
      %s76 = sphi 0, %s60
      %s80 = sphi 0, %s80
      %s82 = sphi 0, %s80
      %s83 = sphi 0, %s82
      %s97 = sphi 0, %s83
      %s101 = sphi 0, %s101
      %s103 = sphi 0, %s101
      %s104 = sphi 0, %s103
      %s118 = sphi 0, %s104
      %s122 = sphi 0, %s122
      %s124 = sphi 0, %s122
      %s125 = sphi 0, %s124
      %s139 = sphi 0, %s125
      %s145 = sphi 0, %s147
      %s148 = sphi 0, %s145
      %s149 = sphi 0, %s148
      %s165 = sphi 0, %s149
    $region4: #{tpu_custom_call.1} parent=1 // loop_header_branch
      %23 = sbr.rel (%p21) target = $region8
    $region5: #{tpu_custom_call.1} parent=1 // loop_body
      %s25 = ssub.s32 %s20, 1
      %s26 = ssub.s32 %s20, 2
      %s27 = sadd.s32 %s20, 1
      %s28 = ssub.s32 %s20, %s27
      %p29 = scmp.eq.s32.totalorder %s28, 0
      %s31 = sadd.s32 %s30, 1
      %s32 = scalar_select %p29, %s30, %s31
      %p35 = pneg %p29
      %p36 = scmp.eq.s32.totalorder %s20, 1
      %p37 = por %p35, %p36
      %p38 = scmp.ne.s32.totalorder %s30, %s33
      %p39 = scmp.eq.s32.totalorder %s20, 0
      %p40 = por %p38, %p39
      %p41 = scmp.ne.s32.totalorder %s30, %s33
      %p42 = scmp.eq.s32.totalorder %s25, 1
      %p43 = por %p41, %p42
      %p44 = scmp.ne.s32.totalorder %s33, %s34
      %p45 = scmp.eq.s32.totalorder %s25, 0
      %p46 = por %p44, %p45
      %p47 = scmp.ne.s32.totalorder %s33, %s34
      %p48 = scmp.eq.s32.totalorder %s26, 1
      %p49 = por %p47, %p48
      %p51 = scmp.ne.s32.totalorder %s34, %s50
      %p52 = scmp.eq.s32.totalorder %s26, 0
      %p53 = por %p51, %p52
      %s54 = ssub.s32 %s20, %s27
      %p55 = scmp.eq.s32.totalorder %s54, 0
      %s57 = sadd.s32 %s56, 1
      %s58 = scalar_select %p55, %s56, %s57
      %p61 = pneg %p55
      %p62 = scmp.eq.s32.totalorder %s20, 1
      %p63 = por %p61, %p62
      %p64 = scmp.ne.s32.totalorder %s56, %s59
      %p65 = scmp.eq.s32.totalorder %s20, 0
      %p66 = por %p64, %p65
      %p67 = scmp.ne.s32.totalorder %s56, %s59
      %p68 = scmp.eq.s32.totalorder %s25, 1
      %p69 = por %p67, %p68
      %p70 = scmp.ne.s32.totalorder %s59, %s60
      %p71 = scmp.eq.s32.totalorder %s25, 0
      %p72 = por %p70, %p71
      %p73 = scmp.ne.s32.totalorder %s59, %s60
      %p74 = scmp.eq.s32.totalorder %s26, 1
      %p75 = por %p73, %p74
      %p77 = scmp.ne.s32.totalorder %s60, %s76
      %p78 = scmp.eq.s32.totalorder %s26, 0
      %p79 = por %p77, %p78
      %s81 = sadd.s32 %s80, 1
      %p84 = scmp.eq.s32.totalorder %s20, 1
      %p85 = scmp.ne.s32.totalorder %s80, %s82
      %p86 = scmp.eq.s32.totalorder %s20, 0
      %p87 = por %p85, %p86
      %p88 = scmp.ne.s32.totalorder %s80, %s82
      %p89 = scmp.eq.s32.totalorder %s25, 1
      %p90 = por %p88, %p89
      %p91 = scmp.ne.s32.totalorder %s82, %s83
      %p92 = scmp.eq.s32.totalorder %s25, 0
      %p93 = por %p91, %p92
      %p94 = scmp.ne.s32.totalorder %s82, %s83
      %p95 = scmp.eq.s32.totalorder %s26, 1
      %p96 = por %p94, %p95
      %p98 = scmp.ne.s32.totalorder %s83, %s97
      %p99 = scmp.eq.s32.totalorder %s26, 0
      %p100 = por %p98, %p99
      %s102 = sadd.s32 %s101, 1
      %p105 = scmp.eq.s32.totalorder %s20, 1
      %p106 = scmp.ne.s32.totalorder %s101, %s103
      %p107 = scmp.eq.s32.totalorder %s20, 0
      %p108 = por %p106, %p107
      %p109 = scmp.ne.s32.totalorder %s101, %s103
      %p110 = scmp.eq.s32.totalorder %s25, 1
      %p111 = por %p109, %p110
      %p112 = scmp.ne.s32.totalorder %s103, %s104
      %p113 = scmp.eq.s32.totalorder %s25, 0
      %p114 = por %p112, %p113
      %p115 = scmp.ne.s32.totalorder %s103, %s104
      %p116 = scmp.eq.s32.totalorder %s26, 1
      %p117 = por %p115, %p116
      %p119 = scmp.ne.s32.totalorder %s104, %s118
      %p120 = scmp.eq.s32.totalorder %s26, 0
      %p121 = por %p119, %p120
      %s123 = sadd.s32 %s122, 1
      %p126 = scmp.eq.s32.totalorder %s20, 1
      %p127 = scmp.ne.s32.totalorder %s122, %s124
      %p128 = scmp.eq.s32.totalorder %s20, 0
      %p129 = por %p127, %p128
      %p130 = scmp.ne.s32.totalorder %s122, %s124
      %p131 = scmp.eq.s32.totalorder %s25, 1
      %p132 = por %p130, %p131
      %p133 = scmp.ne.s32.totalorder %s124, %s125
      %p134 = scmp.eq.s32.totalorder %s25, 0
      %p135 = por %p133, %p134
      %p136 = scmp.ne.s32.totalorder %s124, %s125
      %p137 = scmp.eq.s32.totalorder %s26, 1
      %p138 = por %p136, %p137
      %p140 = scmp.ne.s32.totalorder %s125, %s139
      %p141 = scmp.eq.s32.totalorder %s26, 0
      %p142 = por %p140, %p141
      %s143 = ssub.s32 %s20, %s27
      %p144 = scmp.eq.s32.totalorder %s143, 0
      %s146 = sadd.s32 %s145, 1
      %s147 = scalar_select %p144, %s145, %s146
      %p150 = pneg %p144
      %p151 = scmp.eq.s32.totalorder %s20, 1
      %p152 = por %p150, %p151
      %p153 = scmp.ne.s32.totalorder %s145, %s148
      %p154 = scmp.eq.s32.totalorder %s20, 0
      %p155 = por %p153, %p154
      %p156 = scmp.ne.s32.totalorder %s145, %s148
      %p157 = scmp.eq.s32.totalorder %s25, 1
      %p158 = por %p156, %p157
      %p159 = scmp.ne.s32.totalorder %s148, %s149
      %p160 = scmp.eq.s32.totalorder %s25, 0
      %p161 = por %p159, %p160
      %p162 = scmp.ne.s32.totalorder %s148, %s149
      %p163 = scmp.eq.s32.totalorder %s26, 1
      %p164 = por %p162, %p163
      %p166 = scmp.ne.s32.totalorder %s149, %s165
      %p167 = scmp.eq.s32.totalorder %s26, 0
      %p168 = por %p166, %p167
      %p169 = scmp.le.s32.totalorder 1, %s20
      %p170 = scmp.lt.s32.totalorder %s20, 3
      %p171 = pnand %p169, %p170
      %p172 = pneg %p171
      // Predicated region
      $region9: #{tpu_custom_call.1} parent=5 // pred_check
        _
      $region10: #{tpu_custom_call.1} parent=5 // pred_check_branch
        %174 = sbr.rel (%p171) target = $region12
      $region11: #{tpu_custom_call.1} parent=5 // pred_region
        %s175 = ssub.s32 %s20, 1
        // Predicated region
        $region13: #{tpu_custom_call.1} parent=11 // pred_check
          %p176 = pneg %p93
        $region14: #{tpu_custom_call.1} parent=11 // pred_check_branch
          %178 = sbr.rel (%p176) target = $region16
        $region15: #{tpu_custom_call.1} parent=11 // pred_region
          %s180 = ssub.s32 4096, 4096
          %181 = vsyncadd [#allocation6], %s180
          %s182 = sshll.u32 [#allocation7], 4
          %s183 = int_to_ptr.vmem [resolvable:$true] %s182
          %188 = dma.hbm_to_vmem [thread:$0]  %s2, 4096, %s183, [#allocation6], 256, 256, 16
        $region16: #{tpu_custom_call.1} parent=11 // pred_fallthru
          _
        // Predicated region
        $region17: #{tpu_custom_call.1} parent=11 // pred_check
          %p189 = pneg %p114
        $region18: #{tpu_custom_call.1} parent=11 // pred_check_branch
          %191 = sbr.rel (%p189) target = $region20
        $region19: #{tpu_custom_call.1} parent=11 // pred_region
          _
        $region20: #{tpu_custom_call.1} parent=11 // pred_fallthru
          _
        // Predicated region
        $region21: #{tpu_custom_call.1} parent=11 // pred_check
          %p192 = pneg %p135
        $region22: #{tpu_custom_call.1} parent=11 // pred_check_branch
          %194 = sbr.rel (%p192) target = $region24
        $region23: #{tpu_custom_call.1} parent=11 // pred_region
          _
        $region24: #{tpu_custom_call.1} parent=11 // pred_fallthru
          _
      $region12: #{tpu_custom_call.1} parent=5 // pred_fallthru
        _
      %p195 = scmp.lt.s32.totalorder %s20, 2
      // Predicated region
      $region25: #{tpu_custom_call.1} parent=5 // pred_check
        %p196 = pneg %p195
      $region26: #{tpu_custom_call.1} parent=5 // pred_check_branch
        %198 = sbr.rel (%p196) target = $region28
      $region27: #{tpu_custom_call.1} parent=5 // pred_region
        // Predicated region
        $region29: #{tpu_custom_call.1} parent=27 // pred_check
          %p199 = pneg %p40
        $region30: #{tpu_custom_call.1} parent=27 // pred_check_branch
          %201 = sbr.rel (%p199) target = $region32
        $region31: #{tpu_custom_call.1} parent=27 // pred_region
          %s202 = sand.u32 %s30, 1
          %s203 = scalar_lea.sflag [#allocation3], %s202
          %s204 = sand.u32 %s30, 1
          %s205 = smul.addr %s204, 8
          %s206 = scalar_lea.vmem [#allocation2], %s205
          %s208 = ssub.s32 128, 128
          %209 = vsyncadd %s203, %s208
          %s210 = smul.addr %s20, 128
          %s211 = scalar_lea.hbm %s0, %s210
          %s213 = sshll.u32 %s206, 4
          %s214 = int_to_ptr.vmem [resolvable:$true] %s213
          %216 = dma.hbm_to_vmem [thread:$0]  %s211, 128, %s214, %s203
        $region32: #{tpu_custom_call.1} parent=27 // pred_fallthru
          _
        // Predicated region
        $region33: #{tpu_custom_call.1} parent=27 // pred_check
          %p217 = pneg %p66
        $region34: #{tpu_custom_call.1} parent=27 // pred_check_branch
          %219 = sbr.rel (%p217) target = $region36
        $region35: #{tpu_custom_call.1} parent=27 // pred_region
          %s220 = sand.u32 %s20, 1
          %s221 = scalar_lea.sflag [#allocation6], %s220
          %s222 = sand.u32 %s56, 1
          %s223 = smul.addr %s222, 8
          %s224 = scalar_lea.vmem [#allocation5], %s223
          %s226 = ssub.s32 128, 128
          %227 = vsyncadd %s221, %s226
          %s228 = smul.addr %s20, 128
          %s229 = scalar_lea.hbm %s1, %s228
          %s231 = sshll.u32 %s224, 4
          %s232 = int_to_ptr.vmem [resolvable:$true] %s231
          %234 = dma.hbm_to_vmem [thread:$0]  %s229, 128, %s232, %s221
        $region36: #{tpu_custom_call.1} parent=27 // pred_fallthru
          _
      $region28: #{tpu_custom_call.1} parent=5 // pred_fallthru
        _
      %p235 = scmp.le.s32.totalorder 1, %s20
      %p236 = scmp.lt.s32.totalorder %s20, 3
      %p237 = pnand %p235, %p236
      %p238 = pneg %p237
      // Predicated region
      $region37: #{tpu_custom_call.1} parent=5 // pred_check
        _
      $region38: #{tpu_custom_call.1} parent=5 // pred_check_branch
        %240 = sbr.rel (%p237) target = $region40
      $region39: #{tpu_custom_call.1} parent=5 // pred_region
        %s241 = ssub.s32 %s20, 1
        %s242 = sand.u32 %s33, 1
        %s243 = scalar_lea.sflag [#allocation3], %s242
        %s244 = sand.u32 %s33, 1
        %s245 = smul.addr %s244, 8
        %s246 = scalar_lea.vmem [#allocation2], %s245
        // Predicated region
        $region41: #{tpu_custom_call.1} parent=39 // pred_check
          %p247 = pneg %p46
        $region42: #{tpu_custom_call.1} parent=39 // pred_check_branch
          %249 = sbr.rel (%p247) target = $region44
        $region43: #{tpu_custom_call.1} parent=39 // pred_region
          %250 = dma.done %s243, 128
        $region44: #{tpu_custom_call.1} parent=39 // pred_fallthru
          _
        %s251 = sand.u32 %s25, 1
        %s252 = scalar_lea.sflag [#allocation6], %s251
        %s253 = sand.u32 %s59, 1
        %s254 = smul.addr %s253, 8
        %s255 = scalar_lea.vmem [#allocation5], %s254
        // Predicated region
        $region45: #{tpu_custom_call.1} parent=39 // pred_check
          %p256 = pneg %p72
        $region46: #{tpu_custom_call.1} parent=39 // pred_check_branch
          %258 = sbr.rel (%p256) target = $region48
        $region47: #{tpu_custom_call.1} parent=39 // pred_region
          %259 = dma.done %s252, 128
        $region48: #{tpu_custom_call.1} parent=39 // pred_fallthru
          _
        // Predicated region
        $region49: #{tpu_custom_call.1} parent=39 // pred_check
          %p260 = pneg %p93
        $region50: #{tpu_custom_call.1} parent=39 // pred_check_branch
          %262 = sbr.rel (%p260) target = $region52
        $region51: #{tpu_custom_call.1} parent=39 // pred_region
          %263 = dma.done [#allocation6], 4096
        $region52: #{tpu_custom_call.1} parent=39 // pred_fallthru
          _
        %s264 = sand.u32 %s33, 1
        %s265 = scalar_lea.sflag [#allocation3], %s264
        %s266 = sand.u32 %s33, 1
        %s267 = smul.addr %s266, 8
        %s268 = scalar_lea.vmem [#allocation2], %s267
        %p269 = pneg %p46
        %p270 = pneg %p43
        %s271 = sand.u32 %s25, 1
        %s272 = scalar_lea.sflag [#allocation6], %s271
        %s273 = sand.u32 %s59, 1
        %s274 = smul.addr %s273, 8
        %s275 = scalar_lea.vmem [#allocation5], %s274
        %p276 = pneg %p72
        %p277 = pneg %p69
        %p278 = pneg %p93
        %p279 = pneg %p90
        %p280 = pneg %p114
        %p281 = pneg %p111
        %p282 = pneg %p135
        %p283 = pneg %p132
        %p284 = pneg %p161
        %p285 = pneg %p158
        %s286 = sand.u32 %s148, 1
        %s287 = scalar_lea.sflag [#allocation4], %s286
        %s288 = sand.u32 %s148, 1
        %s289 = smul.addr %s288, 8
        %s290 = scalar_lea.vmem [#allocation8], %s289
        %v291 = vld [vmem:[%s246] sm:$0xff]
        %v292 = vld [vmem:[%s255] sm:$0xff]
        %v293 = vld [vmem:[#allocation7] sm:$0xff]
        %v294 = vld [vmem:[#allocation7 + $0x8] sm:$0xff]
        %v295 = vld [vmem:[#allocation7 + $0x10] sm:$0xff]
        %v296 = vld [vmem:[#allocation7 + $0x18] sm:$0xff]
        %v297 = vld [vmem:[#allocation7 + $0x20] sm:$0xff]
        %v298 = vld [vmem:[#allocation7 + $0x28] sm:$0xff]
        %v299 = vld [vmem:[#allocation7 + $0x30] sm:$0xff]
        %v300 = vld [vmem:[#allocation7 + $0x38] sm:$0xff]
        %v301 = vld [vmem:[#allocation7 + $0x40] sm:$0xff]
        %v302 = vld [vmem:[#allocation7 + $0x48] sm:$0xff]
        %v303 = vld [vmem:[#allocation7 + $0x50] sm:$0xff]
        %v304 = vld [vmem:[#allocation7 + $0x58] sm:$0xff]
        %v305 = vld [vmem:[#allocation7 + $0x60] sm:$0xff]
        %v306 = vld [vmem:[#allocation7 + $0x68] sm:$0xff]
        %v307 = vld [vmem:[#allocation7 + $0x70] sm:$0xff]
        %v308 = vld [vmem:[#allocation7 + $0x78] sm:$0xff]
        %v309 = vld [vmem:[#allocation7 + $0x80] sm:$0xff]
        %v310 = vld [vmem:[#allocation7 + $0x88] sm:$0xff]
        %v311 = vld [vmem:[#allocation7 + $0x90] sm:$0xff]
        %v312 = vld [vmem:[#allocation7 + $0x98] sm:$0xff]
        %v313 = vld [vmem:[#allocation7 + $0xa0] sm:$0xff]
        %v314 = vld [vmem:[#allocation7 + $0xa8] sm:$0xff]
        %v315 = vld [vmem:[#allocation7 + $0xb0] sm:$0xff]
        %v316 = vld [vmem:[#allocation7 + $0xb8] sm:$0xff]
        %v317 = vld [vmem:[#allocation7 + $0xc0] sm:$0xff]
        %v318 = vld [vmem:[#allocation7 + $0xc8] sm:$0xff]
        %v319 = vld [vmem:[#allocation7 + $0xd0] sm:$0xff]
        %v320 = vld [vmem:[#allocation7 + $0xd8] sm:$0xff]
        %v321 = vld [vmem:[#allocation7 + $0xe0] sm:$0xff]
        %v322 = vld [vmem:[#allocation7 + $0xe8] sm:$0xff]
        %v323 = vld [vmem:[#allocation7 + $0xf0] sm:$0xff]
        %v324 = vld [vmem:[#allocation7 + $0xf8] sm:$0xff]
        %325 = vmatprep.subr.mxu0 %v324
        %326 = vmatpush1.msra.mxu0 %v323
        %327 = vmatprep.subr.mxu0 %v322
        %328 = vmatpush1.msra.mxu0 %v321
        %329 = vmatprep.subr.mxu0 %v320
        %330 = vmatpush1.msra.mxu0 %v319
        %331 = vmatprep.subr.mxu0 %v318
        %332 = vmatpush1.msra.mxu0 %v317
        %333 = vmatprep.subr.mxu0 %v316
        %334 = vmatpush1.msra.mxu0 %v315
        %335 = vmatprep.subr.mxu0 %v314
        %336 = vmatpush1.msra.mxu0 %v313
        %337 = vmatprep.subr.mxu0 %v312
        %338 = vmatpush1.msra.mxu0 %v311
        %339 = vmatprep.subr.mxu0 %v310
        %340 = vmatpush1.msra.mxu0 %v309
        %341 = vmatprep.subr.mxu0 %v308
        %342 = vmatpush1.msra.mxu0 %v307
        %343 = vmatprep.subr.mxu0 %v306
        %344 = vmatpush1.msra.mxu0 %v305
        %345 = vmatprep.subr.mxu0 %v304
        %346 = vmatpush1.msra.mxu0 %v303
        %347 = vmatprep.subr.mxu0 %v302
        %348 = vmatpush1.msra.mxu0 %v301
        %349 = vmatprep.subr.mxu0 %v300
        %350 = vmatpush1.msra.mxu0 %v299
        %351 = vmatprep.subr.mxu0 %v298
        %352 = vmatpush1.msra.mxu0 %v297
        %353 = vmatprep.subr.mxu0 %v296
        %354 = vmatpush1.msra.mxu0 %v295
        %355 = vmatprep.subr.mxu0 %v294
        %356 = vmatpush1.msra.mxu0 %v293
        %357 = vmatprep.subr.mxu0 0.0
        %358 = vmatpush2.msra.mxu0 0.0
        %359 = vmatprep.subr.mxu0 0.0
        %360 = vmatpush2.msra.mxu0 0.0
        %361 = vmatprep.subr.mxu0 0.0
        %362 = vmatpush2.msra.mxu0 0.0
        %363 = vmatprep.subr.mxu0 0.0
        %364 = vmatpush2.msra.mxu0 0.0
        %365 = vmatprep.subr.mxu0 0.0
        %366 = vmatpush2.msra.mxu0 0.0
        %367 = vmatprep.subr.mxu0 0.0
        %368 = vmatpush2.msra.mxu0 0.0
        %369 = vmatprep.subr.mxu0 0.0
        %370 = vmatpush2.msra.mxu0 0.0
        %371 = vmatprep.subr.mxu0 0.0
        %372 = vmatpush2.msra.mxu0 0.0
        %373 = vmatprep.subr.mxu0 0.0
        %374 = vmatpush2.msra.mxu0 0.0
        %375 = vmatprep.subr.mxu0 0.0
        %376 = vmatpush2.msra.mxu0 0.0
        %377 = vmatprep.subr.mxu0 0.0
        %378 = vmatpush2.msra.mxu0 0.0
        %379 = vmatprep.subr.mxu0 0.0
        %380 = vmatpush2.msra.mxu0 0.0
        %381 = vmatprep.subr.mxu0 0.0
        %382 = vmatpush2.msra.mxu0 0.0
        %383 = vmatprep.subr.mxu0 0.0
        %384 = vmatpush2.msra.mxu0 0.0
        %385 = vmatprep.subr.mxu0 0.0
        %386 = vmatpush2.msra.mxu0 0.0
        %387 = vmatprep.subr.mxu0 0.0
        %388 = vmatpush2.msra.mxu0 0.0
        %389 = vmatprep.mubr.f32.mxu0 0.0
        %390 = vmatmul.mubr.f32.gmra.mxu0 %v292
        %v391 = vpop.f32.mrf.mxu0
        %v392 = vadd.f32 0.0, %v391
        %v393 = vpop.f32.mrf.mxu0
        %v394 = vadd.f32 0.0, %v393
        %395 = vdwg.mxu0
        %v396 = vld [vmem:[%s3] sm:$0x1]
        %v398 = vlaneseq
        %v399 = vshrl.u32 %v398, 7
        %v400 = vsub.s32 0, %v399
        %v401 = vrot.slane %v396, %v400
        %v403 = vadd.f32 %v401, %v392
        %v404 = vld [vmem:[%s4] sm:$0x1]
        %v406 = vlaneseq
        %v407 = vshrl.u32 %v406, 7
        %v408 = vsub.s32 0, %v407
        %v409 = vrot.slane %v404, %v408
        %v411 = vadd.f32 %v409, %v394
        %412 = vadd.xlane.f32.xlu0 %v291
        %v413 = vpop.xlane.xlu0 %412
        %v414 = vmul.f32 %v413, 0.03125
        %v415 = vlaneseq
        %v416 = vand.u32 %v415, 127
        %vm417 = vcmp.lt.s32.totalorder %v416, 32
        %v418 = vsub.f32 %v291, %v414
        %v419 = vsel %vm417, %v418, 0.0
        %v420 = vmul.f32 %v419, %v419
        %421 = vadd.xlane.f32.xlu0 %v420
        %v422 = vpop.xlane.xlu0 %421
        %v423 = vmul.f32 %v422, 0.03125
        %v424 = vadd.f32 %v423, 1e-12
        %v425 = vrsqrt.pop %v424
        %v426 = vmul.f32 %v419, %v425
        %v427 = vmul.f32 %v403, %v426
        %v428 = vadd.f32 %v427, %v411
        %429 = vst [vmem:[%s290] sm:$0xff] %v428
        %s430 = sand.u32 %s148, 1
        %s431 = scalar_lea.sflag [#allocation4], %s430
        %s432 = sand.u32 %s148, 1
        %s433 = smul.addr %s432, 8
        %s434 = scalar_lea.vmem [#allocation8], %s433
        // Predicated region
        $region53: #{tpu_custom_call.1} parent=39 // pred_check
          %p435 = pneg %p158
        $region54: #{tpu_custom_call.1} parent=39 // pred_check_branch
          %437 = sbr.rel (%p435) target = $region56
        $region55: #{tpu_custom_call.1} parent=39 // pred_region
          %s439 = ssub.s32 128, 128
          %440 = vsyncadd %s431, %s439
          %s441 = smul.addr %s25, 128
          %s442 = scalar_lea.hbm %s5, %s441
          %s444 = sshll.u32 %s434, 4
          %s445 = int_to_ptr.vmem [resolvable:$true] %s444
          %447 = dma.vmem_to_hbm [thread:$0]  %s445, 128, %s442, %s431
        $region56: #{tpu_custom_call.1} parent=39 // pred_fallthru
          _
      $region40: #{tpu_custom_call.1} parent=5 // pred_fallthru
        _
      %p448 = scmp.le.s32.totalorder 2, %s20
      // Predicated region
      $region57: #{tpu_custom_call.1} parent=5 // pred_check
        %p449 = pneg %p448
      $region58: #{tpu_custom_call.1} parent=5 // pred_check_branch
        %451 = sbr.rel (%p449) target = $region60
      $region59: #{tpu_custom_call.1} parent=5 // pred_region
        %s452 = ssub.s32 %s20, 2
        // Predicated region
        $region61: #{tpu_custom_call.1} parent=59 // pred_check
          %p453 = pneg %p164
        $region62: #{tpu_custom_call.1} parent=59 // pred_check_branch
          %455 = sbr.rel (%p453) target = $region64
        $region63: #{tpu_custom_call.1} parent=59 // pred_region
          %s456 = sand.u32 %s149, 1
          %s457 = scalar_lea.sflag [#allocation4], %s456
          %s458 = sand.u32 %s149, 1
          %s459 = smul.addr %s458, 8
          %s460 = scalar_lea.vmem [#allocation8], %s459
          %461 = dma.done %s457, 128
        $region64: #{tpu_custom_call.1} parent=59 // pred_fallthru
          _
      $region60: #{tpu_custom_call.1} parent=5 // pred_fallthru
        _
    $region6: #{tpu_custom_call.1} parent=1 // loop_footer
      %s24 = sadd.s32 1, %s20
    $region7: #{tpu_custom_call.1} parent=1 // loop_footer_branch
      %19 = sbr.rel target = $region3
    $region8: #{tpu_custom_call.1} parent=1 // loop_exit
      _
    %462 = vsyncpa [#allocation3], 1
    %s463 = scalar_lea.sflag [#allocation3], 1
    %464 = vsyncpa %s463, 1
    %465 = vsyncpa [#allocation6], 1
    %s466 = scalar_lea.sflag [#allocation6], 1
    %467 = vsyncpa %s466, 1
    %468 = vsyncpa [#allocation4], 1
    %s469 = scalar_lea.sflag [#allocation4], 1
    %470 = vsyncpa %s469, 1

</llo_original>
